<compile_context>
chip_gen: v5e
topology: v5e:2x2
jax: 0.10.0
libtpu: 0.0.40
codegen_flags: <defaults>
</compile_context>

<pallas_src>
import functools

import jax
import jax.numpy as jnp
from jax.experimental import pallas as pl
from jax.experimental.pallas import tpu as pltpu


def _model_loss_kernel(x_ref, w1_ref, b1_ref, w2_ref, b2_ref, t_ref, loss_ref,
                       *, inv_n):
    x = x_ref[...]                                                  # [B, IN]

    # Layer 1: Linear + bias + ReLU.  Bias add is a VPU broadcast (free slot).
    h = jnp.dot(x, w1_ref[...], preferred_element_type=jnp.float32)
    h = jnp.maximum(h + b1_ref[...], 0.0)                          # [B, HID]

    # Layer 2: Linear + bias.
    y = jnp.dot(h, w2_ref[...], preferred_element_type=jnp.float32)
    y = y + b2_ref[...]                                            # [B, OUT]

    # L1 loss, 'mean' reduction; divide replaced by static reciprocal multiply.
    diff = jnp.abs(y - t_ref[...])
    loss_ref[0, 0] = jnp.sum(diff) * inv_n


def model_with_loss_fn(x, t, w1, b1, w2, b2):
    """Returns scalar L1 loss = mean(|relu(x@w1+b1)@w2+b2 - t|)."""
    B, IN = x.shape
    HID = w1.shape[1]
    OUT = w2.shape[1]
    assert t.shape == (B, OUT)
    # Lane-width guards: everything must fit a single [*, 128] lane span
    # (turns a future silent-wrong-answer into a trace-time error).
    assert HID <= 128 and OUT <= 128 and IN <= 512, (IN, HID, OUT)

    # 2-D biases for clean (sublane, lane) layout inside the kernel; a reshape
    # of a (H,) / (1,H) array is metadata-only, no extra HLO fusion or HBM trip.
    b1_2d = b1.reshape(1, HID).astype(jnp.float32)
    b2_2d = b2.reshape(1, OUT).astype(jnp.float32)

    kernel = functools.partial(_model_loss_kernel, inv_n=1.0 / float(B * OUT))

    flops = 2 * B * IN * HID + 2 * B * HID * OUT + 4 * B * OUT + B * HID
    bytes_accessed = 4 * (x.size + w1.size + HID + w2.size + OUT + t.size + 1)

    loss = pl.pallas_call(
        kernel,
        out_shape=jax.ShapeDtypeStruct((1, 1), jnp.float32),
        in_specs=[
            pl.BlockSpec(memory_space=pltpu.VMEM),   # x   [B, IN]
            pl.BlockSpec(memory_space=pltpu.VMEM),   # w1  [IN, HID]
            pl.BlockSpec(memory_space=pltpu.VMEM),   # b1  [1, HID]
            pl.BlockSpec(memory_space=pltpu.VMEM),   # w2  [HID, OUT]
            pl.BlockSpec(memory_space=pltpu.VMEM),   # b2  [1, OUT]
            pl.BlockSpec(memory_space=pltpu.VMEM),   # t   [B, OUT]
        ],
        out_specs=pl.BlockSpec(memory_space=pltpu.SMEM),
        cost_estimate=pl.CostEstimate(
            flops=flops, transcendentals=0, bytes_accessed=bytes_accessed),
    )(x.astype(jnp.float32), w1.astype(jnp.float32), b1_2d,
      w2.astype(jnp.float32), b2_2d, t.astype(jnp.float32))
    return loss[0, 0]


def _ref_loss(x, t, w1, b1, w2, b2):
    h = jnp.maximum(x @ w1 + b1.reshape(1, -1), 0.0)
    y = h @ w2 + b2.reshape(1, -1)
    return jnp.mean(jnp.abs(y - t))


if __name__ == "__main__":
    # Small shapes consistent with MyModel: Linear(20, 15) -> ReLU -> Linear(15, 10)
    B, IN, HID, OUT = 8, 20, 15, 10

    key = jax.random.PRNGKey(0)
    kx, kt, kw1, kb1, kw2, kb2 = jax.random.split(key, 6)

    x = jax.random.normal(kx, (B, IN), dtype=jnp.float32)
    t = jax.random.normal(kt, (B, OUT), dtype=jnp.float32)

    # Deterministic parameter init (Linear weights stored as [in, out]).
    w1 = jax.random.normal(kw1, (IN, HID), dtype=jnp.float32) * 0.1
    b1 = jax.random.normal(kb1, (1, HID), dtype=jnp.float32) * 0.1
    w2 = jax.random.normal(kw2, (HID, OUT), dtype=jnp.float32) * 0.1
    b2 = jax.random.normal(kb2, (1, OUT), dtype=jnp.float32) * 0.1

    loss = jax.jit(model_with_loss_fn)(x, t, w1, b1, w2, b2)
    jax.block_until_ready(loss)

    ref = _ref_loss(x, t, w1, b1, w2, b2)
    assert jnp.allclose(loss, ref, rtol=1e-5, atol=1e-5), (loss, ref)

    # TODO(synk): ppe.reporting.report is host-side bookkeeping with no kernel
    # equivalent; the kernel just returns the scalar loss.
    print("KERNEL_OK")
</pallas_src>

<mosaic_0001>
module attributes {stable_mosaic.version = 11 : i64} {
  func.func @_model_loss_kernel(%arg0: memref<8x20xf32, #tpu.memory_space<vmem>>, %arg1: memref<20x15xf32, #tpu.memory_space<vmem>>, %arg2: memref<1x15xf32, #tpu.memory_space<vmem>>, %arg3: memref<15x10xf32, #tpu.memory_space<vmem>>, %arg4: memref<1x10xf32, #tpu.memory_space<vmem>>, %arg5: memref<8x10xf32, #tpu.memory_space<vmem>>, %arg6: memref<1x1xf32, #tpu.memory_space<smem>>) attributes {dimension_semantics = [], scalar_prefetch = 0 : i64, scratch_operands = 0 : i64, tpu.core_type = #tpu.core_type<tc>} {
    %c0 = arith.constant 0 : index
    %c0_0 = arith.constant 0 : index
    %0 = vector.load %arg0[%c0, %c0_0] : memref<8x20xf32, #tpu.memory_space<vmem>>, vector<8x20xf32>
    %c0_1 = arith.constant 0 : index
    %c0_2 = arith.constant 0 : index
    %1 = vector.load %arg1[%c0_1, %c0_2] : memref<20x15xf32, #tpu.memory_space<vmem>>, vector<20x15xf32>
    %cst = arith.constant dense<0.000000e+00> : vector<8x15xf32>
    %2 = tpu.matmul %0, %1, %cst {dimension_numbers = #tpu.dot_dimension_numbers<[1], [0], [0], [1], [0, 0, 1, 1], [], []>} : vector<8x20xf32>, vector<20x15xf32>, vector<8x15xf32> -> vector<8x15xf32>
    %c0_3 = arith.constant 0 : index
    %c0_4 = arith.constant 0 : index
    %3 = vector.load %arg2[%c0_3, %c0_4] : memref<1x15xf32, #tpu.memory_space<vmem>>, vector<1x15xf32>
    %4 = vector.broadcast %3 : vector<1x15xf32> to vector<8x15xf32>
    %5 = arith.addf %2, %4 : vector<8x15xf32>
    %cst_5 = arith.constant 0.000000e+00 : f32
    %6 = vector.broadcast %cst_5 : f32 to vector<8x15xf32>
    %7 = arith.maximumf %5, %6 : vector<8x15xf32>
    %c0_6 = arith.constant 0 : index
    %c0_7 = arith.constant 0 : index
    %8 = vector.load %arg3[%c0_6, %c0_7] : memref<15x10xf32, #tpu.memory_space<vmem>>, vector<15x10xf32>
    %cst_8 = arith.constant dense<0.000000e+00> : vector<8x10xf32>
    %9 = tpu.matmul %7, %8, %cst_8 {dimension_numbers = #tpu.dot_dimension_numbers<[1], [0], [0], [1], [0, 0, 1, 1], [], []>} : vector<8x15xf32>, vector<15x10xf32>, vector<8x10xf32> -> vector<8x10xf32>
    %c0_9 = arith.constant 0 : index
    %c0_10 = arith.constant 0 : index
    %10 = vector.load %arg4[%c0_9, %c0_10] : memref<1x10xf32, #tpu.memory_space<vmem>>, vector<1x10xf32>
    %11 = vector.broadcast %10 : vector<1x10xf32> to vector<8x10xf32>
    %12 = arith.addf %9, %11 : vector<8x10xf32>
    %c0_11 = arith.constant 0 : index
    %c0_12 = arith.constant 0 : index
    %13 = vector.load %arg5[%c0_11, %c0_12] : memref<8x10xf32, #tpu.memory_space<vmem>>, vector<8x10xf32>
    %14 = arith.subf %12, %13 : vector<8x10xf32>
    %15 = math.absf %14 : vector<8x10xf32>
    %16 = vector.shape_cast %15 : vector<8x10xf32> to vector<1x8x10xf32>
    %cst_13 = arith.constant dense<0.000000e+00> : vector<1xf32>
    %17 = vector.multi_reduction <add>, %16, %cst_13 [1, 2] : vector<1x8x10xf32> to vector<1xf32>
    %18 = vector.shape_cast %17 : vector<1xf32> to vector<1x1x1xf32>
    %19 = vector.extract %18[0, 0, 0] : f32 from vector<1x1x1xf32>
    %cst_14 = arith.constant 1.250000e-02 : f32
    %20 = arith.mulf %19, %cst_14 : f32
    %c0_15 = arith.constant 0 : index
    %c0_16 = arith.constant 0 : index
    %21 = memref.load %arg6[%c0_15, %c0_16] : memref<1x1xf32, #tpu.memory_space<smem>>
    memref.store %20, %arg6[%c0_15, %c0_16] : memref<1x1xf32, #tpu.memory_space<smem>>
    return
  }
}

</mosaic_0001>

<llo_original>
// kernel: model_with_loss_fn.1
$region0: #{model_with_loss_fn.1}
  #allocation0 [shape = 'u32[]', space=smem, size = 0x4, offset = 0x4, fixed_abs, tag = 'smem constant byte address 0x4 - core index']
  #allocation1 [shape = 'u32[72,128]{1,0:T(1,128)}', space=vmem, size = 0x9000, scoped, tag = 'internal scratch']
  %s0 = inlined_call_operand.vmem [shape: f32[8,20], index: 0, kind: input, shape index: {}]
  %s1 = inlined_call_operand.vmem [shape: f32[20,15], index: 1, kind: input, shape index: {}]
  %s2 = inlined_call_operand.vmem [shape: f32[1,15], index: 2, kind: input, shape index: {}]
  %s3 = inlined_call_operand.vmem [shape: f32[15,10], index: 3, kind: input, shape index: {}]
  %s4 = inlined_call_operand.vmem [shape: f32[1,10], index: 4, kind: input, shape index: {}]
  %s5 = inlined_call_operand.vmem [shape: f32[8,10], index: 5, kind: input, shape index: {}]
  %s6 = inlined_call_operand.hbm [shape: f32[1,1], index: 6, kind: output, shape index: {}]
  %s7 = sld [smem:[#allocation0]]
  $region34: #{model_with_loss_fn.1} parent=0
    _
  %s9 = ssub.s32 1, %s7
  %s10 = scalar_select 0, %s9, %s7
  $region1: #{model_with_loss_fn.1} parent=0
    #allocation2 [shape = 'u8[512]{0}', space=smem, size = 0x200, scoped, tag = 'output window, operand 0, single buffered']
    #allocation3 [shape = 's32[1]{0}', space=sflag, size = 0x4, scoped, tag = 'scoped memory for model_with_loss_fn.1']
    %11 = vsyncpa [#allocation3], 0
    // Predicated region
    $region2: #{model_with_loss_fn.1} parent=1 // pred_check
      _
    $region3: #{model_with_loss_fn.1} parent=1 // pred_check_branch
      %13 = sbr.rel (0) target = $region5
    $region4: #{model_with_loss_fn.1} parent=1 // pred_region
      _
    $region5: #{model_with_loss_fn.1} parent=1 // pred_fallthru
      _
    // Predicated region
    $region6: #{model_with_loss_fn.1} parent=1 // pred_check
      _
    $region7: #{model_with_loss_fn.1} parent=1 // pred_check_branch
      %15 = sbr.rel (0) target = $region9
    $region8: #{model_with_loss_fn.1} parent=1 // pred_region
      _
    $region9: #{model_with_loss_fn.1} parent=1 // pred_fallthru
      _
    // Predicated region
    $region10: #{model_with_loss_fn.1} parent=1 // pred_check
      _
    $region11: #{model_with_loss_fn.1} parent=1 // pred_check_branch
      %17 = sbr.rel (0) target = $region13
    $region12: #{model_with_loss_fn.1} parent=1 // pred_region
      _
    $region13: #{model_with_loss_fn.1} parent=1 // pred_fallthru
      _
    // Predicated region
    $region14: #{model_with_loss_fn.1} parent=1 // pred_check
      _
    $region15: #{model_with_loss_fn.1} parent=1 // pred_check_branch
      %19 = sbr.rel (0) target = $region17
    $region16: #{model_with_loss_fn.1} parent=1 // pred_region
      _
    $region17: #{model_with_loss_fn.1} parent=1 // pred_fallthru
      _
    // Predicated region
    $region18: #{model_with_loss_fn.1} parent=1 // pred_check
      _
    $region19: #{model_with_loss_fn.1} parent=1 // pred_check_branch
      %21 = sbr.rel (0) target = $region21
    $region20: #{model_with_loss_fn.1} parent=1 // pred_region
      _
    $region21: #{model_with_loss_fn.1} parent=1 // pred_fallthru
      _
    // Predicated region
    $region22: #{model_with_loss_fn.1} parent=1 // pred_check
      _
    $region23: #{model_with_loss_fn.1} parent=1 // pred_check_branch
      %23 = sbr.rel (0) target = $region25
    $region24: #{model_with_loss_fn.1} parent=1 // pred_region
      _
    $region25: #{model_with_loss_fn.1} parent=1 // pred_fallthru
      _
    %v24 = vld [vmem:[%s0] sm:$0xff]
    %v25 = vld [vmem:[%s1] sm:$0xff]
    %v26 = vld [vmem:[%s1 + $0x8] sm:$0xff]
    %v27 = vld [vmem:[%s1 + $0x10] sm:$0xf]
    %v28 = vld [vmem:[%s2] sm:$0x1]
    %v30 = vperm.slane %v28, 0
    %vm32 = vcmask 162816
    %v34 = vsel %vm32, %v24, 0
    %vm36 = vcmask 1043456
    %v38 = vsel %vm36, %v27, 0
    %40 = vmatpush.msra.mxu0 0.0
    %41 = vmatpush.msra.mxu0 0.0
    %42 = vmatpush.msra.mxu0 0.0
    %43 = vmatpush.msra.mxu0 0.0
    %44 = vmatpush.msra.mxu0 0.0
    %45 = vmatpush.msra.mxu0 0.0
    %46 = vmatpush.msra.mxu0 0.0
    %47 = vmatpush.msra.mxu0 0.0
    %48 = vmatpush.msra.mxu0 0.0
    %49 = vmatpush.msra.mxu0 0.0
    %50 = vmatpush.msra.mxu0 0.0
    %51 = vmatpush.msra.mxu0 0.0
    %52 = vmatpush.msra.mxu0 0.0
    %53 = vmatpush.msra.mxu0 %v38
    %54 = vmatpush.msra.mxu0 %v26
    %55 = vmatpush.msra.mxu0 %v25
    %56 = vmatmul.f32.gmra.mxu0 %v34
    %v57 = vpop.f32.mrf.mxu0
    %v58 = vadd.f32 %v30, %v57
    %59 = vdwg.mxu0
    %v60 = vmax.f32 %v58, 0.0
    %v61 = vld [vmem:[%s3] sm:$0xff]
    %v62 = vld [vmem:[%s3 + $0x8] sm:$0x7f]
    %v63 = vld [vmem:[%s4] sm:$0x1]
    %v65 = vperm.slane %v63, 0
    %vm67 = vcmask 121856
    %v69 = vsel %vm67, %v60, 0
    %vm71 = vcmask 1046528
    %v73 = vsel %vm71, %v62, 0
    %75 = vmatpush.msra.mxu0 0.0
    %76 = vmatpush.msra.mxu0 0.0
    %77 = vmatpush.msra.mxu0 0.0
    %78 = vmatpush.msra.mxu0 0.0
    %79 = vmatpush.msra.mxu0 0.0
    %80 = vmatpush.msra.mxu0 0.0
    %81 = vmatpush.msra.mxu0 0.0
    %82 = vmatpush.msra.mxu0 0.0
    %83 = vmatpush.msra.mxu0 0.0
    %84 = vmatpush.msra.mxu0 0.0
    %85 = vmatpush.msra.mxu0 0.0
    %86 = vmatpush.msra.mxu0 0.0
    %87 = vmatpush.msra.mxu0 0.0
    %88 = vmatpush.msra.mxu0 0.0
    %89 = vmatpush.msra.mxu0 %v73
    %90 = vmatpush.msra.mxu0 %v61
    %91 = vmatmul.f32.gmra.mxu0 %v69
    %v92 = vpop.f32.mrf.mxu0
    %v93 = vadd.f32 %v65, %v92
    %94 = vdwg.mxu0
    %v95 = vld [vmem:[%s5] sm:$0xff]
    %v96 = vsub.f32 %v93, %v95
    %v97 = vand.u32 2147483647, %v96
    %vm98 = vcmask 80896
    %v99 = vsel %vm98, %v97, 0.0
    %100 = vadd.xlane.f32.xlu0 %v99
    %v101 = vpop.xlane.xlu0 %100
    %v102 = vrot.slane %v101, 4
    %v103 = vadd.f32 %v101, %v102
    %v104 = vrot.slane %v103, 2
    %v105 = vadd.f32 %v103, %v104
    %v106 = vrot.slane %v105, 1
    %v107 = vadd.f32 %v105, %v106
    %s108 = vtos %v107
    %s109 = smul.f32 %s108, 0.0125
    %s110 = scalar_lea.smem [#allocation2], 0
    %111 = sst [smem:[%s110]] %s109
    // Predicated region
    $region26: #{model_with_loss_fn.1} parent=1 // pred_check
      _
    $region27: #{model_with_loss_fn.1} parent=1 // pred_check_branch
      %113 = sbr.rel (0) target = $region29
    $region28: #{model_with_loss_fn.1} parent=1 // pred_region
      %115 = vsyncadd [#allocation3], 0
      %s117 = sshll.u32 %s6, 4
      %s118 = int_to_ptr.hbm [resolvable:$true] %s117
      %120 = dma.smem_to_hbm [#allocation2], 16, %s118, [#allocation3]
    $region29: #{model_with_loss_fn.1} parent=1 // pred_fallthru
      _
    // Predicated region
    $region30: #{model_with_loss_fn.1} parent=1 // pred_check
      _
    $region31: #{model_with_loss_fn.1} parent=1 // pred_check_branch
      %122 = sbr.rel (0) target = $region33
    $region32: #{model_with_loss_fn.1} parent=1 // pred_region
      %124 = dma.done [#allocation3], 16
    $region33: #{model_with_loss_fn.1} parent=1 // pred_fallthru
      _
    %125 = sfence
    %126 = vsyncpa [#allocation3], 1

</llo_original>
